<compile_context>
chip_gen: v7x
topology: tpu7x:2x2x1
jax: 0.10.0
libtpu: 0.0.40
codegen_flags: <defaults>
</compile_context>

<pallas_src>
import functools

import jax
import jax.numpy as jnp
import numpy as np
from jax.experimental import pallas as pl
from jax.experimental.pallas import tpu as pltpu


def _mean_loss_kernel(in_ref, tgt_ref, out_ref, s_in, s_tgt, s_cnt, *,
                      sparse: bool, C: int, HW: int):
    j = pl.program_id(1)

    # --- init per-batch accumulators at the start of each H sweep ---
    @pl.when(j == 0)
    def _init():
        s_in[...] = jnp.zeros_like(s_in)
        s_tgt[...] = jnp.zeros_like(s_tgt)
        s_cnt[...] = jnp.zeros_like(s_cnt)

    x = in_ref[...].astype(jnp.float32)   # (C, Ht, W)
    t = tgt_ref[...].astype(jnp.float32)  # (C, Ht, W)

    if sparse:
        # valid spatial positions: any channel of target nonzero.
        valid = (jnp.sum(jnp.abs(t), axis=0) != 0.0).astype(jnp.float32)  # (Ht, W)
        s_in[...] += jnp.sum(x * valid[None], axis=0)
        s_tgt[...] += jnp.sum(t * valid[None], axis=0)
        s_cnt[...] += valid
    else:
        s_in[...] += jnp.sum(x, axis=0)
        s_tgt[...] += jnp.sum(t, axis=0)

    # --- finalize: single cross-lane reduce per batch, lane-dense output ---
    @pl.when(j == pl.num_programs(1) - 1)
    def _fin():
        sum_in = jnp.sum(s_in[...])
        sum_tgt = jnp.sum(s_tgt[...])
        if sparse:
            cnt = jnp.float32(C) * jnp.sum(s_cnt[...])
        else:
            cnt = jnp.float32(C * HW)
        sub = jax.lax.broadcasted_iota(jnp.int32, (8, 128), 0)
        tile = jnp.where(sub == 0, sum_in,
                         jnp.where(sub == 1, sum_tgt,
                                   jnp.where(sub == 2, cnt,
                                             jnp.float32(0.0))))
        out_ref[0] = tile


def _pick_ht(H: int, C: int, W: int, itemsize: int,
             target_bytes: int = 4 * 1024 * 1024) -> int:
    """Pick an H tile that divides H, is a multiple of 8 (or full H), keeps a
    block under `target_bytes`, and (when possible) leaves >= 2 grid steps
    along H for software pipelining."""
    divisors = [h for h in range(8, H + 1, 8) if H % h == 0]
    if not divisors:
        return H  # tiny / odd H: full extent is always legal
    row_bytes = max(C * W * itemsize, 1)
    fit = [h for h in divisors if h * row_bytes <= target_bytes]
    if not fit:
        return min(divisors)
    multi = [h for h in fit if H // h >= 2]
    return max(multi) if multi else max(fit)


def mean_loss(input_img, input_flow, target_flow, *, sparse: bool = False):
    """Pallas implementation of MeanLossModule.forward.

    input_img is accepted to match the PyTorch signature but is unused,
    exactly as in the reference forward. Inputs may be f32 or bf16 (the
    kernel accumulates in f32 either way).
    """
    del input_img  # unused in the reference forward
    N, C, H, W = input_flow.shape
    assert target_flow.shape == (N, C, H, W)

    Ht = _pick_ht(H, C, W, jnp.dtype(input_flow.dtype).itemsize)
    n_h = H // Ht

    kernel = functools.partial(_mean_loss_kernel, sparse=sparse, C=C, HW=H * W)

    in_spec = pl.BlockSpec((pl.Squeezed(), C, Ht, W),
                           lambda i, j: (i, 0, j, 0))

    partials = pl.pallas_call(
        kernel,
        out_shape=jax.ShapeDtypeStruct((N, 8, 128), jnp.float32),
        grid=(N, n_h),
        in_specs=[in_spec, in_spec],
        out_specs=pl.BlockSpec((1, 8, 128), lambda i, j: (i, 0, 0)),
        scratch_shapes=[
            pltpu.VMEM((Ht, W), jnp.float32),  # sum_c input * valid
            pltpu.VMEM((Ht, W), jnp.float32),  # sum_c target * valid
            pltpu.VMEM((Ht, W), jnp.float32),  # valid spatial-pixel count
        ],
        compiler_params=pltpu.CompilerParams(
            dimension_semantics=("parallel", "arbitrary")),
    )(input_flow, target_flow)

    # Negligible finalization in plain JAX (per-batch partials -> scalars).
    sum_in = jnp.sum(partials[:, 0, 0])
    sum_tgt = jnp.sum(partials[:, 1, 0])
    cnt = jnp.sum(partials[:, 2, 0])
    # TODO(synk): error_fn is a user-supplied callable (None by default in the
    # PyTorch module); fixed here to the absolute difference of the means.
    return jnp.abs(sum_in / cnt - sum_tgt / cnt)


def _reference(input_flow, target_flow, *, sparse: bool):
    """Pure-JAX reference matching the PyTorch forward."""
    if sparse:
        mask = jnp.sum(jnp.abs(target_flow), axis=1, keepdims=True) == 0
        valid = jnp.broadcast_to(~mask, target_flow.shape).astype(jnp.float32)
        cnt = jnp.sum(valid)
        in_mean = jnp.sum(input_flow * valid) / cnt
        tgt_mean = jnp.sum(target_flow * valid) / cnt
    else:
        in_mean = jnp.mean(input_flow)
        tgt_mean = jnp.mean(target_flow)
    return jnp.abs(in_mean - tgt_mean)


if __name__ == "__main__":
    key = jax.random.PRNGKey(0)
    k_img, k_in, k_tgt, k_mask = jax.random.split(key, 4)

    N, C, H, W = 2, 4, 16, 16
    input_img = jax.random.normal(k_img, (N, 3, H, W), dtype=jnp.float32)
    input_flow = jax.random.normal(k_in, (N, C, H, W), dtype=jnp.float32)
    target_flow = jax.random.normal(k_tgt, (N, C, H, W), dtype=jnp.float32)

    # --- dense (sparse=False) path ---
    out_dense = jax.block_until_ready(
        mean_loss(input_img, input_flow, target_flow, sparse=False))
    ref_dense = _reference(input_flow, target_flow, sparse=False)
    np.testing.assert_allclose(np.asarray(out_dense), np.asarray(ref_dense),
                               rtol=1e-5, atol=1e-6)

    # --- sparse path: zero out some spatial positions across all channels ---
    spatial_keep = (jax.random.uniform(k_mask, (N, 1, H, W)) > 0.3
                    ).astype(jnp.float32)
    target_sparse = target_flow * spatial_keep
    out_sparse = jax.block_until_ready(
        mean_loss(input_img, input_flow, target_sparse, sparse=True))
    ref_sparse = _reference(input_flow, target_sparse, sparse=True)
    np.testing.assert_allclose(np.asarray(out_sparse), np.asarray(ref_sparse),
                               rtol=1e-5, atol=1e-6)

    print("KERNEL_OK")
</pallas_src>

<mosaic_0001>
module attributes {stable_mosaic.version = 11 : i64} {
  func.func @_mean_loss_kernel(%arg0: i32, %arg1: i32, %arg2: memref<1x4x8x16xf32, #tpu.memory_space<vmem>>, %arg3: memref<1x4x8x16xf32, #tpu.memory_space<vmem>>, %arg4: memref<1x8x128xf32, #tpu.memory_space<vmem>>, %arg5: memref<8x16xf32, #tpu.memory_space<vmem>>, %arg6: memref<8x16xf32, #tpu.memory_space<vmem>>, %arg7: memref<8x16xf32, #tpu.memory_space<vmem>>) attributes {dimension_semantics = [#tpu.dimension_semantics<parallel>, #tpu.dimension_semantics<arbitrary>], iteration_bounds = array<i64: 2, 2>, scalar_prefetch = 0 : i64, scratch_operands = 3 : i64, tpu.core_type = #tpu.core_type<tc>, window_params = [{transform_indices = @transform_0, window_bounds = array<i64: 1, 4, 8, 16>}, {transform_indices = @transform_1, window_bounds = array<i64: 1, 4, 8, 16>}, {transform_indices = @transform_2, window_bounds = array<i64: 1, 8, 128>}]} {
    %c0_i32 = arith.constant 0 : i32
    %0 = arith.cmpi eq, %arg1, %c0_i32 : i32
    %1 = arith.extui %0 : i1 to i32
    %c0_i32_0 = arith.constant 0 : i32
    %2 = arith.cmpi ne, %1, %c0_i32_0 : i32
    scf.if %2 {
      %cst_18 = arith.constant 0.000000e+00 : f32
      %18 = vector.broadcast %cst_18 : f32 to vector<8x16xf32>
      %c0_19 = arith.constant 0 : index
      %c0_20 = arith.constant 0 : index
      %19 = vector.load %arg5[%c0_19, %c0_20] : memref<8x16xf32, #tpu.memory_space<vmem>>, vector<8x16xf32>
      tpu.vector_store %arg5[%c0_19, %c0_20], %18 {strides = array<i32>} : memref<8x16xf32, #tpu.memory_space<vmem>>, vector<8x16xf32>,
      %cst_21 = arith.constant 0.000000e+00 : f32
      %20 = vector.broadcast %cst_21 : f32 to vector<8x16xf32>
      %c0_22 = arith.constant 0 : index
      %c0_23 = arith.constant 0 : index
      %21 = vector.load %arg6[%c0_22, %c0_23] : memref<8x16xf32, #tpu.memory_space<vmem>>, vector<8x16xf32>
      tpu.vector_store %arg6[%c0_22, %c0_23], %20 {strides = array<i32>} : memref<8x16xf32, #tpu.memory_space<vmem>>, vector<8x16xf32>,
      %cst_24 = arith.constant 0.000000e+00 : f32
      %22 = vector.broadcast %cst_24 : f32 to vector<8x16xf32>
      %c0_25 = arith.constant 0 : index
      %c0_26 = arith.constant 0 : index
      %23 = vector.load %arg7[%c0_25, %c0_26] : memref<8x16xf32, #tpu.memory_space<vmem>>, vector<8x16xf32>
      tpu.vector_store %arg7[%c0_25, %c0_26], %22 {strides = array<i32>} : memref<8x16xf32, #tpu.memory_space<vmem>>, vector<8x16xf32>,
    } else {
    }
    %c0 = arith.constant 0 : index
    %c0_1 = arith.constant 0 : index
    %c0_2 = arith.constant 0 : index
    %c0_3 = arith.constant 0 : index
    %3 = vector.load %arg2[%c0, %c0_1, %c0_2, %c0_3] : memref<1x4x8x16xf32, #tpu.memory_space<vmem>>, vector<1x4x8x16xf32>
    %4 = vector.shape_cast %3 : vector<1x4x8x16xf32> to vector<4x8x16xf32>
    %c0_4 = arith.constant 0 : index
    %c0_5 = arith.constant 0 : index
    %c0_6 = arith.constant 0 : index
    %c0_7 = arith.constant 0 : index
    %5 = vector.load %arg3[%c0_4, %c0_5, %c0_6, %c0_7] : memref<1x4x8x16xf32, #tpu.memory_space<vmem>>, vector<1x4x8x16xf32>
    %6 = vector.shape_cast %5 : vector<1x4x8x16xf32> to vector<4x8x16xf32>
    %c0_8 = arith.constant 0 : index
    %c0_9 = arith.constant 0 : index
    %7 = vector.load %arg5[%c0_8, %c0_9] : memref<8x16xf32, #tpu.memory_space<vmem>>, vector<8x16xf32>
    %cst = arith.constant dense<0.000000e+00> : vector<8x16xf32>
    %8 = vector.multi_reduction <add>, %4, %cst [0] : vector<4x8x16xf32> to vector<8x16xf32>
    %9 = arith.addf %7, %8 : vector<8x16xf32>
    %c0_10 = arith.constant 0 : index
    %c0_11 = arith.constant 0 : index
    %10 = vector.load %arg5[%c0_10, %c0_11] : memref<8x16xf32, #tpu.memory_space<vmem>>, vector<8x16xf32>
    tpu.vector_store %arg5[%c0_10, %c0_11], %9 {strides = array<i32>} : memref<8x16xf32, #tpu.memory_space<vmem>>, vector<8x16xf32>,
    %c0_12 = arith.constant 0 : index
    %c0_13 = arith.constant 0 : index
    %11 = vector.load %arg6[%c0_12, %c0_13] : memref<8x16xf32, #tpu.memory_space<vmem>>, vector<8x16xf32>
    %cst_14 = arith.constant dense<0.000000e+00> : vector<8x16xf32>
    %12 = vector.multi_reduction <add>, %6, %cst_14 [0] : vector<4x8x16xf32> to vector<8x16xf32>
    %13 = arith.addf %11, %12 : vector<8x16xf32>
    %c0_15 = arith.constant 0 : index
    %c0_16 = arith.constant 0 : index
    %14 = vector.load %arg6[%c0_15, %c0_16] : memref<8x16xf32, #tpu.memory_space<vmem>>, vector<8x16xf32>
    tpu.vector_store %arg6[%c0_15, %c0_16], %13 {strides = array<i32>} : memref<8x16xf32, #tpu.memory_space<vmem>>, vector<8x16xf32>,
    %c1_i32 = arith.constant 1 : i32
    %15 = arith.cmpi eq, %arg1, %c1_i32 : i32
    %16 = arith.extui %15 : i1 to i32
    %c0_i32_17 = arith.constant 0 : i32
    %17 = arith.cmpi ne, %16, %c0_i32_17 : i32
    scf.if %17 {
      %c0_18 = arith.constant 0 : index
      %c0_19 = arith.constant 0 : index
      %18 = vector.load %arg5[%c0_18, %c0_19] : memref<8x16xf32, #tpu.memory_space<vmem>>, vector<8x16xf32>
      %19 = vector.shape_cast %18 : vector<8x16xf32> to vector<1x8x16xf32>
      %cst_20 = arith.constant dense<0.000000e+00> : vector<1xf32>
      %20 = vector.multi_reduction <add>, %19, %cst_20 [1, 2] : vector<1x8x16xf32> to vector<1xf32>
      %21 = vector.shape_cast %20 : vector<1xf32> to vector<1x1x1xf32>
      %22 = vector.extract %21[0, 0, 0] : f32 from vector<1x1x1xf32>
      %c0_21 = arith.constant 0 : index
      %c0_22 = arith.constant 0 : index
      %23 = vector.load %arg6[%c0_21, %c0_22] : memref<8x16xf32, #tpu.memory_space<vmem>>, vector<8x16xf32>
      %24 = vector.shape_cast %23 : vector<8x16xf32> to vector<1x8x16xf32>
      %cst_23 = arith.constant dense<0.000000e+00> : vector<1xf32>
      %25 = vector.multi_reduction <add>, %24, %cst_23 [1, 2] : vector<1x8x16xf32> to vector<1xf32>
      %26 = vector.shape_cast %25 : vector<1xf32> to vector<1x1x1xf32>
      %27 = vector.extract %26[0, 0, 0] : f32 from vector<1x1x1xf32>
      %28 = tpu.iota {dimensions = array<i32: 0>} : vector<8x128xi32>
      %c0_i32_24 = arith.constant 0 : i32
      %29 = vector.broadcast %c0_i32_24 : i32 to vector<8x128xi32>
      %30 = arith.cmpi eq, %28, %29 : vector<8x128xi32>
      %c1_i32_25 = arith.constant 1 : i32
      %31 = vector.broadcast %c1_i32_25 : i32 to vector<8x128xi32>
      %32 = arith.cmpi eq, %28, %31 : vector<8x128xi32>
      %c2_i32 = arith.constant 2 : i32
      %33 = vector.broadcast %c2_i32 : i32 to vector<8x128xi32>
      %34 = arith.cmpi eq, %28, %33 : vector<8x128xi32>
      %cst_26 = arith.constant 1.024000e+03 : f32
      %cst_27 = arith.constant 0.000000e+00 : f32
      %35 = vector.broadcast %cst_26 : f32 to vector<8x128xf32>
      %36 = vector.broadcast %cst_27 : f32 to vector<8x128xf32>
      %37 = arith.select %34, %35, %36 : vector<8x128xi1>, vector<8x128xf32>
      %38 = vector.broadcast %27 : f32 to vector<8x128xf32>
      %39 = arith.select %32, %38, %37 : vector<8x128xi1>, vector<8x128xf32>
      %40 = vector.broadcast %22 : f32 to vector<8x128xf32>
      %41 = arith.select %30, %40, %39 : vector<8x128xi1>, vector<8x128xf32>
      %c0_28 = arith.constant 0 : index
      %c0_29 = arith.constant 0 : index
      %c0_30 = arith.constant 0 : index
      %42 = vector.load %arg4[%c0_28, %c0_29, %c0_30] : memref<1x8x128xf32, #tpu.memory_space<vmem>>, vector<1x8x128xf32>
      %43 = vector.shape_cast %42 : vector<1x8x128xf32> to vector<8x128xf32>
      %44 = vector.shape_cast %41 : vector<8x128xf32> to vector<1x8x128xf32>
      tpu.vector_store %arg4[%c0_28, %c0_29, %c0_30], %44 {strides = array<i32>} : memref<1x8x128xf32, #tpu.memory_space<vmem>>, vector<1x8x128xf32>,
    } else {
    }
    return
  }
  func.func @transform_0(%arg0: i32, %arg1: i32) -> (i32, i32, i32, i32) {
    %c0_i32 = arith.constant 0 : i32
    %c0_i32_0 = arith.constant 0 : i32
    %c0_i32_1 = arith.constant 0 : i32
    return %arg0, %c0_i32, %arg1, %c0_i32_0 : i32, i32, i32, i32
  }
  func.func @transform_1(%arg0: i32, %arg1: i32) -> (i32, i32, i32, i32) {
    %c0_i32 = arith.constant 0 : i32
    %c0_i32_0 = arith.constant 0 : i32
    %c0_i32_1 = arith.constant 0 : i32
    return %arg0, %c0_i32, %arg1, %c0_i32_0 : i32, i32, i32, i32
  }
  func.func @transform_2(%arg0: i32, %arg1: i32) -> (i32, i32, i32) {
    %c0_i32 = arith.constant 0 : i32
    %c0_i32_0 = arith.constant 0 : i32
    %c0_i32_1 = arith.constant 0 : i32
    return %arg0, %c0_i32, %c0_i32_0 : i32, i32, i32
  }
}

</mosaic_0001>

<llo_original>
// kernel: tpu_custom_call.1
$region0: #{tpu_custom_call.1}
  #allocation0 [shape = 'u32[]', space=smem, size = 0x4, offset = 0x4, fixed_abs, tag = 'smem constant byte address 0x4 - core index']
  #allocation1 [shape = 'u32[144,128]{1,0:T(1,128)}', space=vmem, size = 0x12000, scoped, tag = 'internal scratch']
  #allocation2 [shape = 'f32[8,16]{1,0:T(8,128)}', space=vmem, size = 0x1000, scoped, tag = 'scratch operand']
  #allocation3 [shape = 'f32[8,16]{1,0:T(8,128)}', space=vmem, size = 0x1000, scoped, tag = 'scratch operand']
  #allocation4 [shape = 'f32[8,16]{1,0:T(8,128)}', space=vmem, size = 0x1000, scoped, tag = 'scratch operand']
  %s0 = inlined_call_operand.hbm [shape: f32[2,4,16,16], index: 0, kind: input, shape index: {}]
  %s1 = inlined_call_operand.hbm [shape: f32[2,4,16,16], index: 1, kind: input, shape index: {}]
  %s2 = inlined_call_operand.hbm [shape: f32[2,8,128], index: 2, kind: output, shape index: {}]
  %s3 = sld [smem:[#allocation0]]
  $region57: #{tpu_custom_call.1} parent=0
    _
  %s5 = ssub.s32 1, %s3
  %s6 = scalar_select 0, %s5, %s3
  $region1: #{tpu_custom_call.1} parent=0
    #allocation5 [shape = 'u8[32768]{0}', space=vmem, size = 0x8000, scoped, tag = 'input window, operand 0']
    #allocation6 [shape = 's32[2]{0}', space=sflag, size = 0x8, scoped, tag = 'scoped memory for tpu_custom_call.1']
    #allocation7 [shape = 's32[2]{0}', space=sflag, size = 0x8, scoped, tag = 'scoped memory for tpu_custom_call.1']
    #allocation8 [shape = 'u8[32768]{0}', space=vmem, size = 0x8000, scoped, tag = 'input window, operand 1']
    #allocation9 [shape = 's32[2]{0}', space=sflag, size = 0x8, scoped, tag = 'scoped memory for tpu_custom_call.1']
    #allocation10 [shape = 'u8[8192]{0}', space=vmem, size = 0x2000, scoped, tag = 'output window, operand 0']
    %7 = vsyncpa [#allocation6], 0
    %s8 = scalar_lea.sflag [#allocation6], 1
    %9 = vsyncpa %s8, 0
    %10 = vsyncpa [#allocation9], 0
    %s11 = scalar_lea.sflag [#allocation9], 1
    %12 = vsyncpa %s11, 0
    %13 = vsyncpa [#allocation7], 0
    %s14 = scalar_lea.sflag [#allocation7], 1
    %15 = vsyncpa %s14, 0
    loop: start=0, step=1, limit=6
    $region2: #{tpu_custom_call.1} parent=1 // loop_pre_header
      _
    $region3: #{tpu_custom_call.1} parent=1 // loop_header
      %s17 = sphi 0, %s21
      %p18 = scmp.ge.s32.totalorder %s17, 6
      %s24 = sphi 0, %s36
      %s25 = sphi 0, %s32
      %s26 = sphi 0, %s24
      %s27 = sphi 0, %s25
      %s28 = sphi 0, %s26
      %s29 = sphi 0, %s27
      %s41 = sphi 0, %s43
      %s44 = sphi 0, %s41
      %s45 = sphi 0, %s44
      %s61 = sphi 0, %s45
      %s69 = sphi 0, %s71
      %s72 = sphi 0, %s69
      %s73 = sphi 0, %s72
      %s89 = sphi 0, %s73
      %s95 = sphi 0, %s97
      %s98 = sphi 0, %s95
      %s99 = sphi 0, %s98
      %s115 = sphi 0, %s99
    $region4: #{tpu_custom_call.1} parent=1 // loop_header_branch
      %20 = sbr.rel (%p18) target = $region8
    $region5: #{tpu_custom_call.1} parent=1 // loop_body
      %s22 = ssub.s32 %s17, 1
      %s23 = ssub.s32 %s17, 2
      %s30 = sadd.s32 1, %s25
      %p31 = scmp.ge.s32.totalorder %s30, 2
      %s32 = scalar_select %p31, 0, %s30
      %s33 = sadd.s32 1, %s24
      %s34 = scalar_select %p31, %s33, %s24
      %p35 = scmp.ge.s32.totalorder %s34, 2
      %s36 = scalar_select %p35, 0, %s34
      %s37 = ssub.s32 %s24, %s36
      %s38 = ssub.s32 %s25, %s32
      %s39 = sor.u32 %s37, %s38
      %p40 = scmp.eq.s32.totalorder %s39, 0
      %s42 = sadd.s32 %s41, 1
      %s43 = scalar_select %p40, %s41, %s42
      %p46 = pneg %p40
      %p47 = scmp.eq.s32.totalorder %s17, 3
      %p48 = por %p46, %p47
      %p49 = scmp.ne.s32.totalorder %s41, %s44
      %p50 = scmp.eq.s32.totalorder %s17, 0
      %p51 = por %p49, %p50
      %p52 = scmp.ne.s32.totalorder %s41, %s44
      %p53 = scmp.eq.s32.totalorder %s22, 3
      %p54 = por %p52, %p53
      %p55 = scmp.ne.s32.totalorder %s44, %s45
      %p56 = scmp.eq.s32.totalorder %s22, 0
      %p57 = por %p55, %p56
      %p58 = scmp.ne.s32.totalorder %s44, %s45
      %p59 = scmp.eq.s32.totalorder %s23, 3
      %p60 = por %p58, %p59
      %p62 = scmp.ne.s32.totalorder %s45, %s61
      %p63 = scmp.eq.s32.totalorder %s23, 0
      %p64 = por %p62, %p63
      %s65 = ssub.s32 %s24, %s36
      %s66 = ssub.s32 %s25, %s32
      %s67 = sor.u32 %s65, %s66
      %p68 = scmp.eq.s32.totalorder %s67, 0
      %s70 = sadd.s32 %s69, 1
      %s71 = scalar_select %p68, %s69, %s70
      %p74 = pneg %p68
      %p75 = scmp.eq.s32.totalorder %s17, 3
      %p76 = por %p74, %p75
      %p77 = scmp.ne.s32.totalorder %s69, %s72
      %p78 = scmp.eq.s32.totalorder %s17, 0
      %p79 = por %p77, %p78
      %p80 = scmp.ne.s32.totalorder %s69, %s72
      %p81 = scmp.eq.s32.totalorder %s22, 3
      %p82 = por %p80, %p81
      %p83 = scmp.ne.s32.totalorder %s72, %s73
      %p84 = scmp.eq.s32.totalorder %s22, 0
      %p85 = por %p83, %p84
      %p86 = scmp.ne.s32.totalorder %s72, %s73
      %p87 = scmp.eq.s32.totalorder %s23, 3
      %p88 = por %p86, %p87
      %p90 = scmp.ne.s32.totalorder %s73, %s89
      %p91 = scmp.eq.s32.totalorder %s23, 0
      %p92 = por %p90, %p91
      %s93 = ssub.s32 %s24, %s36
      %p94 = scmp.eq.s32.totalorder %s93, 0
      %s96 = sadd.s32 %s95, 1
      %s97 = scalar_select %p94, %s95, %s96
      %p100 = pneg %p94
      %p101 = scmp.eq.s32.totalorder %s17, 3
      %p102 = por %p100, %p101
      %p103 = scmp.ne.s32.totalorder %s95, %s98
      %p104 = scmp.eq.s32.totalorder %s17, 0
      %p105 = por %p103, %p104
      %p106 = scmp.ne.s32.totalorder %s95, %s98
      %p107 = scmp.eq.s32.totalorder %s22, 3
      %p108 = por %p106, %p107
      %p109 = scmp.ne.s32.totalorder %s98, %s99
      %p110 = scmp.eq.s32.totalorder %s22, 0
      %p111 = por %p109, %p110
      %p112 = scmp.ne.s32.totalorder %s98, %s99
      %p113 = scmp.eq.s32.totalorder %s23, 3
      %p114 = por %p112, %p113
      %p116 = scmp.ne.s32.totalorder %s99, %s115
      %p117 = scmp.eq.s32.totalorder %s23, 0
      %p118 = por %p116, %p117
      %p119 = scmp.le.s32.totalorder 1, %s17
      %p120 = scmp.lt.s32.totalorder %s17, 5
      %p121 = pnand %p119, %p120
      %p122 = pneg %p121
      // Predicated region
      $region9: #{tpu_custom_call.1} parent=5 // pred_check
        _
      $region10: #{tpu_custom_call.1} parent=5 // pred_check_branch
        %124 = sbr.rel (%p121) target = $region12
      $region11: #{tpu_custom_call.1} parent=5 // pred_region
        %s125 = ssub.s32 %s17, 1
      $region12: #{tpu_custom_call.1} parent=5 // pred_fallthru
        _
      %p126 = scmp.lt.s32.totalorder %s17, 4
      // Predicated region
      $region13: #{tpu_custom_call.1} parent=5 // pred_check
        %p127 = pneg %p126
      $region14: #{tpu_custom_call.1} parent=5 // pred_check_branch
        %129 = sbr.rel (%p127) target = $region16
      $region15: #{tpu_custom_call.1} parent=5 // pred_region
        // Predicated region
        $region17: #{tpu_custom_call.1} parent=15 // pred_check
          %p130 = pneg %p51
        $region18: #{tpu_custom_call.1} parent=15 // pred_check_branch
          %132 = sbr.rel (%p130) target = $region20
        $region19: #{tpu_custom_call.1} parent=15 // pred_region
          %s133 = sand.u32 %s41, 1
          %s134 = scalar_lea.sflag [#allocation6], %s133
          %s135 = sand.u32 %s41, 1
          %s136 = smul.addr %s135, 32
          %s137 = scalar_lea.vmem [#allocation5], %s136
          %s139 = ssub.s32 512, 512
          %140 = vsyncadd %s134, %s139
          %s141 = smul.addr %s24, 8
          %s142 = sadd.s32 %s25, %s141
          %s143 = smul.addr %s142, 128
          %s144 = scalar_lea.hbm %s0, %s143
          %s145 = sshll.u32 %s137, 4
          %s146 = int_to_ptr.vmem [resolvable:$true] %s145
          %151 = dma.hbm_to_vmem [thread:$0]  %s144, 512, %s146, %s134, 256, 128, 8
        $region20: #{tpu_custom_call.1} parent=15 // pred_fallthru
          _
        // Predicated region
        $region21: #{tpu_custom_call.1} parent=15 // pred_check
          %p152 = pneg %p79
        $region22: #{tpu_custom_call.1} parent=15 // pred_check_branch
          %154 = sbr.rel (%p152) target = $region24
        $region23: #{tpu_custom_call.1} parent=15 // pred_region
          %s155 = sand.u32 %s69, 1
          %s156 = scalar_lea.sflag [#allocation9], %s155
          %s157 = sand.u32 %s69, 1
          %s158 = smul.addr %s157, 32
          %s159 = scalar_lea.vmem [#allocation8], %s158
          %s161 = ssub.s32 512, 512
          %162 = vsyncadd %s156, %s161
          %s163 = smul.addr %s24, 8
          %s164 = sadd.s32 %s25, %s163
          %s165 = smul.addr %s164, 128
          %s166 = scalar_lea.hbm %s1, %s165
          %s167 = sshll.u32 %s159, 4
          %s168 = int_to_ptr.vmem [resolvable:$true] %s167
          %173 = dma.hbm_to_vmem [thread:$0]  %s166, 512, %s168, %s156, 256, 128, 8
        $region24: #{tpu_custom_call.1} parent=15 // pred_fallthru
          _
      $region16: #{tpu_custom_call.1} parent=5 // pred_fallthru
        _
      %p174 = scmp.le.s32.totalorder 1, %s17
      %p175 = scmp.lt.s32.totalorder %s17, 5
      %p176 = pnand %p174, %p175
      %p177 = pneg %p176
      // Predicated region
      $region25: #{tpu_custom_call.1} parent=5 // pred_check
        _
      $region26: #{tpu_custom_call.1} parent=5 // pred_check_branch
        %179 = sbr.rel (%p176) target = $region28
      $region27: #{tpu_custom_call.1} parent=5 // pred_region
        %s180 = ssub.s32 %s17, 1
        %s181 = sand.u32 %s44, 1
        %s182 = scalar_lea.sflag [#allocation6], %s181
        %s183 = sand.u32 %s44, 1
        %s184 = smul.addr %s183, 32
        %s185 = scalar_lea.vmem [#allocation5], %s184
        // Predicated region
        $region29: #{tpu_custom_call.1} parent=27 // pred_check
          %p186 = pneg %p57
        $region30: #{tpu_custom_call.1} parent=27 // pred_check_branch
          %188 = sbr.rel (%p186) target = $region32
        $region31: #{tpu_custom_call.1} parent=27 // pred_region
          %189 = dma.done %s182, 512
        $region32: #{tpu_custom_call.1} parent=27 // pred_fallthru
          _
        %s190 = sand.u32 %s72, 1
        %s191 = scalar_lea.sflag [#allocation9], %s190
        %s192 = sand.u32 %s72, 1
        %s193 = smul.addr %s192, 32
        %s194 = scalar_lea.vmem [#allocation8], %s193
        // Predicated region
        $region33: #{tpu_custom_call.1} parent=27 // pred_check
          %p195 = pneg %p85
        $region34: #{tpu_custom_call.1} parent=27 // pred_check_branch
          %197 = sbr.rel (%p195) target = $region36
        $region35: #{tpu_custom_call.1} parent=27 // pred_region
          %198 = dma.done %s191, 512
        $region36: #{tpu_custom_call.1} parent=27 // pred_fallthru
          _
        %s199 = sand.u32 %s44, 1
        %s200 = scalar_lea.sflag [#allocation6], %s199
        %s201 = sand.u32 %s44, 1
        %s202 = smul.addr %s201, 32
        %s203 = scalar_lea.vmem [#allocation5], %s202
        %p204 = pneg %p57
        %p205 = pneg %p54
        %s206 = sand.u32 %s72, 1
        %s207 = scalar_lea.sflag [#allocation9], %s206
        %s208 = sand.u32 %s72, 1
        %s209 = smul.addr %s208, 32
        %s210 = scalar_lea.vmem [#allocation8], %s209
        %p211 = pneg %p85
        %p212 = pneg %p82
        %p213 = pneg %p111
        %p214 = pneg %p108
        %s215 = sand.u32 %s98, 1
        %s216 = scalar_lea.sflag [#allocation7], %s215
        %s217 = sand.u32 %s98, 1
        %s218 = smul.addr %s217, 8
        %s219 = scalar_lea.vmem [#allocation10], %s218
        %p220 = scmp.eq.s32.totalorder %s27, 0
        // Predicated region
        $region37: #{tpu_custom_call.1} parent=27 // pred_check
          %p221 = pneg %p220
        $region38: #{tpu_custom_call.1} parent=27 // pred_check_branch
          %223 = sbr.rel (%p221) target = $region40
        $region39: #{tpu_custom_call.1} parent=27 // pred_region
          %vm224 = vcmask 130048
          %225 = vst.msk [vmem:[#allocation2] sm:$0xff] %vm224, 0.0
          %226 = vst.msk [vmem:[#allocation3] sm:$0xff] %vm224, 0.0
          %227 = vst.msk [vmem:[#allocation4] sm:$0xff] %vm224, 0.0
        $region40: #{tpu_custom_call.1} parent=27 // pred_fallthru
          _
        %v228 = vld [vmem:[%s185] sm:$0xff]
        %v229 = vld [vmem:[%s185 + $0x8] sm:$0xff]
        %v230 = vld [vmem:[%s185 + $0x10] sm:$0xff]
        %v231 = vld [vmem:[%s185 + $0x18] sm:$0xff]
        %v232 = vld [vmem:[%s194] sm:$0xff]
        %v233 = vld [vmem:[%s194 + $0x8] sm:$0xff]
        %v234 = vld [vmem:[%s194 + $0x10] sm:$0xff]
        %v235 = vld [vmem:[%s194 + $0x18] sm:$0xff]
        %v236 = vld [vmem:[#allocation2] sm:$0xff]
        %vm237 = vcmask 130048
        %v238 = vsel %vm237, %v228, 0.0
        %v239 = vsel %vm237, %v229, 0.0
        %v240 = vadd.f32 %v238, %v239
        %v241 = vsel %vm237, %v230, 0.0
        %v242 = vadd.f32 %v240, %v241
        %v243 = vsel %vm237, %v231, 0.0
        %v244 = vadd.f32 %v242, %v243
        %v245 = vadd.f32 %v236, %v244
        %246 = vst.msk [vmem:[#allocation2] sm:$0xff] %vm237, %v245
        %v247 = vld [vmem:[#allocation3] sm:$0xff]
        %v248 = vsel %vm237, %v232, 0.0
        %v249 = vsel %vm237, %v233, 0.0
        %v250 = vadd.f32 %v248, %v249
        %v251 = vsel %vm237, %v234, 0.0
        %v252 = vadd.f32 %v250, %v251
        %v253 = vsel %vm237, %v235, 0.0
        %v254 = vadd.f32 %v252, %v253
        %v255 = vadd.f32 %v247, %v254
        %256 = vst.msk [vmem:[#allocation3] sm:$0xff] %vm237, %v255
        %p257 = scmp.eq.s32.totalorder %s27, 1
        // Predicated region
        $region41: #{tpu_custom_call.1} parent=27 // pred_check
          %p258 = pneg %p257
        $region42: #{tpu_custom_call.1} parent=27 // pred_check_branch
          %260 = sbr.rel (%p258) target = $region44
        $region43: #{tpu_custom_call.1} parent=27 // pred_region
          %v261 = vld [vmem:[#allocation2] sm:$0xff]
          %v262 = vsel %vm237, %v261, 0.0
          %263 = vadd.xlane.f32.xlu0 %v262
          %v264 = vpop.xlane.xlu0 %263
          %v265 = vrot.slane %v264, 4
          %v266 = vadd.f32 %v264, %v265
          %v267 = vrot.slane %v266, 2
          %v268 = vadd.f32 %v266, %v267
          %v269 = vrot.slane %v268, 1
          %v270 = vadd.f32 %v268, %v269
          %s271 = vtos %v270
          %v272 = vld [vmem:[#allocation3] sm:$0xff]
          %v273 = vsel %vm237, %v272, 0.0
          %274 = vadd.xlane.f32.xlu0 %v273
          %v275 = vpop.xlane.xlu0 %274
          %v276 = vrot.slane %v275, 4
          %v277 = vadd.f32 %v275, %v276
          %v278 = vrot.slane %v277, 2
          %v279 = vadd.f32 %v277, %v278
          %v280 = vrot.slane %v279, 1
          %v281 = vadd.f32 %v279, %v280
          %s282 = vtos %v281
          %v283 = vlaneseq
          %v284 = vshrl.u32 %v283, 7
          %vm285 = vcmp.eq.s32.totalorder %v284, 0
          %vm286 = vcmp.eq.s32.totalorder %v284, 1
          %vm287 = vcmp.eq.s32.totalorder %v284, 2
          %v288 = vsel %vm287, 1024.0, 0.0
          %v289 = vstv %s282
          %v290 = vsel %vm286, %v289, %v288
          %v291 = vstv %s271
          %v292 = vsel %vm285, %v291, %v290
          %293 = vst [vmem:[%s219] sm:$0xff] %v292
        $region44: #{tpu_custom_call.1} parent=27 // pred_fallthru
          _
        %s294 = sand.u32 %s98, 1
        %s295 = scalar_lea.sflag [#allocation7], %s294
        %s296 = sand.u32 %s98, 1
        %s297 = smul.addr %s296, 8
        %s298 = scalar_lea.vmem [#allocation10], %s297
        // Predicated region
        $region45: #{tpu_custom_call.1} parent=27 // pred_check
          %p299 = pneg %p108
        $region46: #{tpu_custom_call.1} parent=27 // pred_check_branch
          %301 = sbr.rel (%p299) target = $region48
        $region47: #{tpu_custom_call.1} parent=27 // pred_region
          %s303 = ssub.s32 128, 128
          %304 = vsyncadd %s295, %s303
          %s305 = smul.addr %s26, 128
          %s306 = scalar_lea.hbm %s2, %s305
          %s308 = sshll.u32 %s298, 4
          %s309 = int_to_ptr.vmem [resolvable:$true] %s308
          %311 = dma.vmem_to_hbm [thread:$0]  %s309, 128, %s306, %s295
        $region48: #{tpu_custom_call.1} parent=27 // pred_fallthru
          _
      $region28: #{tpu_custom_call.1} parent=5 // pred_fallthru
        _
      %p312 = scmp.le.s32.totalorder 2, %s17
      // Predicated region
      $region49: #{tpu_custom_call.1} parent=5 // pred_check
        %p313 = pneg %p312
      $region50: #{tpu_custom_call.1} parent=5 // pred_check_branch
        %315 = sbr.rel (%p313) target = $region52
      $region51: #{tpu_custom_call.1} parent=5 // pred_region
        %s316 = ssub.s32 %s17, 2
        // Predicated region
        $region53: #{tpu_custom_call.1} parent=51 // pred_check
          %p317 = pneg %p114
        $region54: #{tpu_custom_call.1} parent=51 // pred_check_branch
          %319 = sbr.rel (%p317) target = $region56
        $region55: #{tpu_custom_call.1} parent=51 // pred_region
          %s320 = sand.u32 %s99, 1
          %s321 = scalar_lea.sflag [#allocation7], %s320
          %s322 = sand.u32 %s99, 1
          %s323 = smul.addr %s322, 8
          %s324 = scalar_lea.vmem [#allocation10], %s323
          %325 = dma.done %s321, 128
        $region56: #{tpu_custom_call.1} parent=51 // pred_fallthru
          _
      $region52: #{tpu_custom_call.1} parent=5 // pred_fallthru
        _
    $region6: #{tpu_custom_call.1} parent=1 // loop_footer
      %s21 = sadd.s32 1, %s17
    $region7: #{tpu_custom_call.1} parent=1 // loop_footer_branch
      %16 = sbr.rel target = $region3
    $region8: #{tpu_custom_call.1} parent=1 // loop_exit
      _
    %326 = vsyncpa [#allocation6], 1
    %s327 = scalar_lea.sflag [#allocation6], 1
    %328 = vsyncpa %s327, 1
    %329 = vsyncpa [#allocation9], 1
    %s330 = scalar_lea.sflag [#allocation9], 1
    %331 = vsyncpa %s330, 1
    %332 = vsyncpa [#allocation7], 1
    %s333 = scalar_lea.sflag [#allocation7], 1
    %334 = vsyncpa %s333, 1

</llo_original>
